<compile_context>
chip_gen: v5e
topology: v5e:2x2
jax: 0.10.0
libtpu: 0.0.40
codegen_flags: <defaults>
</compile_context>

<pallas_src>
import math

import jax
import jax.numpy as jnp
from jax.experimental import pallas as pl
from jax.experimental.pallas import tpu as pltpu  # noqa: F401

# ---------------- config (small, deterministic) ----------------
BATCH = 2
SEQ = 8
TOKENS = BATCH * SEQ                     # 16 flattened (batch, pos) rows
HIDDEN = 32
NUM_HEADS = 4
HEAD_DIM = HIDDEN // NUM_HEADS           # 8
INTERMEDIATE = 64
MAX_POS = 128
RMS_EPS = 1e-6
ROPE_SCALING = 3.0                       # CarFormerAttention(config, scaling_factor=3)
ROPE_THETA = 10000.0


# ---------------- fused layer kernel (single invocation, no grid) -------------
def carformer_layer_kernel(x_ref, cos_ref, sin_ref, mask_ref,
                           wqkv_ref, rot_ref, wo_ref,
                           g1_ref, g2_ref, wup_ref, wdn_ref,
                           o_ref):
    x = x_ref[...]                                        # (T, H) f32

    def rmsnorm(v, gamma):
        var = jnp.mean(v * v, axis=-1, keepdims=True)
        return v * jax.lax.rsqrt(var + RMS_EPS) * gamma

    # ---- input_layernorm ----
    h = rmsnorm(x, g1_ref[...])                           # (T, H), gamma is (1, H)

    # ---- fused head-major QKV projection (one batched einsum) ----
    h_b = jnp.broadcast_to(h[None, :, :], (NUM_HEADS, TOKENS, HIDDEN))
    qkv = jnp.einsum("nth,nhd->ntd", h_b, wqkv_ref[...],
                     preferred_element_type=jnp.float32)  # (NH, T, 3*D)
    q = qkv[..., 0:HEAD_DIM]                              # already scaled by 1/sqrt(D)
    k = qkv[..., HEAD_DIM:2 * HEAD_DIM]
    v = qkv[..., 2 * HEAD_DIM:3 * HEAD_DIM]

    # ---- RoPE (linear position scaling folded into the cos/sin tables) ----
    cos = cos_ref[...][None, :, :]                        # (1, T, D)
    sin = sin_ref[...][None, :, :]
    rot = rot_ref[...]                                    # (NH, D, D): x @ rot == rotate_half(x)
    q = q * cos + jnp.einsum("ntd,nde->nte", q, rot,
                             preferred_element_type=jnp.float32) * sin
    k = k * cos + jnp.einsum("ntd,nde->nte", k, rot,
                             preferred_element_type=jnp.float32) * sin

    # ---- attention for all heads at once ----
    s = jnp.einsum("nqd,nkd->nqk", q, k,
                   preferred_element_type=jnp.float32)    # (NH, T, T)
    s = s + mask_ref[...][None, :, :]                     # causal + same-batch additive bias

    m = jnp.max(s, axis=-1, keepdims=True)
    p = jnp.exp(s - m)
    p = p * pl.reciprocal(jnp.sum(p, axis=-1, keepdims=True), approx=True)

    ctx = jnp.einsum("nqk,nkd->nqd", p, v,
                     preferred_element_type=jnp.float32)  # (NH, T, D)
    attn = jnp.sum(
        jnp.einsum("ntd,ndh->nth", ctx, wo_ref[...],
                   preferred_element_type=jnp.float32),
        axis=0)                                           # (T, H)

    # ---- first residual ----
    x1 = x + attn

    # ---- post_attention_layernorm + MLP ----
    h2 = rmsnorm(x1, g2_ref[...])
    up = jnp.dot(h2, wup_ref[...], preferred_element_type=jnp.float32)   # (T, I)
    up = jax.nn.gelu(up, approximate=True)
    dn = jnp.dot(up, wdn_ref[...], preferred_element_type=jnp.float32)   # (T, H)

    # ---- second residual ----
    o_ref[...] = x1 + dn


def carformer_layer(x, cos, sin, mask, wqkv, rot, wo3, g1, g2, wup, wdn):
    b, s, hdim = x.shape
    x_flat = x.reshape(b * s, hdim)
    out_flat = pl.pallas_call(
        carformer_layer_kernel,
        out_shape=jax.ShapeDtypeStruct((b * s, hdim), jnp.float32),
    )(x_flat, cos, sin, mask, wqkv, rot, wo3, g1, g2, wup, wdn)
    return out_flat.reshape(b, s, hdim)


# ---------------- host-side parameter / table construction ----------------
def make_params(key):
    ks = jax.random.split(key, 6)
    # attention projections: default nn.Linear init ~ U(-1/sqrt(H), 1/sqrt(H)); stored as (in, out)
    lim = 1.0 / math.sqrt(HIDDEN)
    wq = jax.random.uniform(ks[0], (HIDDEN, HIDDEN), jnp.float32, -lim, lim)
    wk = jax.random.uniform(ks[1], (HIDDEN, HIDDEN), jnp.float32, -lim, lim)
    wv = jax.random.uniform(ks[2], (HIDDEN, HIDDEN), jnp.float32, -lim, lim)
    wo = jax.random.uniform(ks[3], (HIDDEN, HIDDEN), jnp.float32, -lim, lim)
    # MLP: Wang (2021) init
    std = 2.0 / (MAX_POS * math.sqrt(HIDDEN))
    wup = std * jax.random.normal(ks[4], (HIDDEN, INTERMEDIATE), jnp.float32)
    wdn = std * jax.random.normal(ks[5], (INTERMEDIATE, HIDDEN), jnp.float32)
    # RMSNorm weights init to ones
    g1 = jnp.ones((1, HIDDEN), jnp.float32)
    g2 = jnp.ones((1, HIDDEN), jnp.float32)
    return wq, wk, wv, wo, g1, g2, wup, wdn


def pack_attention_weights(wq, wk, wv, wo):
    # (H, H) -> head-major (NH, H, D); fused qkv -> (NH, H, 3D).
    # The 1/sqrt(head_dim) attention scale is folded into the Q weights
    # (exact: RoPE is a linear map, so scaling commutes with it).
    def per_head(w):
        return jnp.transpose(w.reshape(HIDDEN, NUM_HEADS, HEAD_DIM), (1, 0, 2))
    q_scaled = per_head(wq) * (1.0 / math.sqrt(HEAD_DIM))
    wqkv = jnp.concatenate([q_scaled, per_head(wk), per_head(wv)], axis=-1)
    wo3 = wo.reshape(NUM_HEADS, HEAD_DIM, HIDDEN)          # head n rows -> (D, H)
    return wqkv, wo3


def make_rope(seq_len):
    inv_freq = 1.0 / (ROPE_THETA ** (jnp.arange(0, HEAD_DIM, 2, dtype=jnp.float32) / HEAD_DIM))
    pos = jnp.arange(seq_len, dtype=jnp.float32) / ROPE_SCALING   # linear scaling, factor 3
    freqs = jnp.outer(pos, inv_freq)                              # (S, D/2)
    emb = jnp.concatenate([freqs, freqs], axis=-1)                # (S, D)
    return jnp.cos(emb), jnp.sin(emb)


def make_rotate_half_matrix():
    # R such that x @ R == concat(-x[D/2:], x[:D/2]); tiled per head -> (NH, D, D)
    half = HEAD_DIM // 2
    r = jnp.zeros((HEAD_DIM, HEAD_DIM), jnp.float32)
    r = r.at[half + jnp.arange(half), jnp.arange(half)].set(-1.0)
    r = r.at[jnp.arange(half), half + jnp.arange(half)].set(1.0)
    return jnp.tile(r[None], (NUM_HEADS, 1, 1))


def make_mask(batch, seq):
    # additive bias over flattened (batch*seq) rows: causal AND same-batch
    idx = jnp.arange(batch * seq)
    bid = idx // seq
    pos = idx % seq
    ok = (bid[:, None] == bid[None, :]) & (pos[None, :] <= pos[:, None])
    return jnp.where(ok, 0.0, -1e30).astype(jnp.float32)


# ---------------- pure-JAX reference (for a sanity check) ----------------
def reference_layer(x, cos, sin, wq, wk, wv, wo, g1, g2, wup, wdn):
    b, s, hdim = x.shape

    def rms(v, g):
        var = jnp.mean(v * v, axis=-1, keepdims=True)
        return v * jax.lax.rsqrt(var + RMS_EPS) * g

    def rot_half(t):
        d = t.shape[-1] // 2
        return jnp.concatenate([-t[..., d:], t[..., :d]], axis=-1)

    h = rms(x, g1)
    q = h @ wq
    k = h @ wk
    v = h @ wv

    def split(t):
        return t.reshape(b, s, NUM_HEADS, HEAD_DIM).transpose(0, 2, 1, 3)  # (B, NH, S, D)

    q, k, v = split(q), split(k), split(v)
    cos_b, sin_b = cos[None, None], sin[None, None]
    q = q * cos_b + rot_half(q) * sin_b
    k = k * cos_b + rot_half(k) * sin_b

    scores = jnp.einsum("bnqd,bnkd->bnqk", q, k) / math.sqrt(HEAD_DIM)
    causal = jnp.tril(jnp.ones((s, s), bool))
    scores = jnp.where(causal[None, None], scores, -1e30)
    p = jax.nn.softmax(scores, axis=-1)
    ctx = jnp.einsum("bnqk,bnkd->bnqd", p, v)
    ctx = ctx.transpose(0, 2, 1, 3).reshape(b, s, hdim)
    x1 = x + ctx @ wo

    h2 = rms(x1, g2)
    up = jax.nn.gelu(h2 @ wup, approximate=True)
    return x1 + up @ wdn


if __name__ == "__main__":
    key = jax.random.PRNGKey(0)
    k_x, k_p = jax.random.split(key)
    x = jax.random.normal(k_x, (BATCH, SEQ, HIDDEN), jnp.float32)
    wq, wk, wv, wo, g1, g2, wup, wdn = make_params(k_p)

    wqkv, wo3 = pack_attention_weights(wq, wk, wv, wo)
    cos, sin = make_rope(SEQ)
    cos_t = jnp.tile(cos, (BATCH, 1))        # (B*S, D) — position = token index within its batch
    sin_t = jnp.tile(sin, (BATCH, 1))
    rot = make_rotate_half_matrix()
    mask = make_mask(BATCH, SEQ)

    layer = jax.jit(carformer_layer)
    out = layer(x, cos_t, sin_t, mask, wqkv, rot, wo3, g1, g2, wup, wdn)
    out = jax.block_until_ready(out)

    assert out.shape == (BATCH, SEQ, HIDDEN)
    assert bool(jnp.all(jnp.isfinite(out)))

    ref = reference_layer(x, cos, sin, wq, wk, wv, wo, g1, g2, wup, wdn)
    assert bool(jnp.allclose(out, ref, rtol=5e-2, atol=5e-2)), "kernel/reference mismatch"

    print("KERNEL_OK")
</pallas_src>

<mosaic_0001>
module attributes {stable_mosaic.version = 11 : i64} {
  func.func @carformer_layer_kernel(%arg0: memref<16x32xf32, #tpu.memory_space<vmem>>, %arg1: memref<16x8xf32, #tpu.memory_space<vmem>>, %arg2: memref<16x8xf32, #tpu.memory_space<vmem>>, %arg3: memref<16x16xf32, #tpu.memory_space<vmem>>, %arg4: memref<4x32x24xf32, #tpu.memory_space<vmem>>, %arg5: memref<4x8x8xf32, #tpu.memory_space<vmem>>, %arg6: memref<4x8x32xf32, #tpu.memory_space<vmem>>, %arg7: memref<1x32xf32, #tpu.memory_space<vmem>>, %arg8: memref<1x32xf32, #tpu.memory_space<vmem>>, %arg9: memref<32x64xf32, #tpu.memory_space<vmem>>, %arg10: memref<64x32xf32, #tpu.memory_space<vmem>>, %arg11: memref<16x32xf32, #tpu.memory_space<vmem>>) attributes {dimension_semantics = [], scalar_prefetch = 0 : i64, scratch_operands = 0 : i64, tpu.core_type = #tpu.core_type<tc>} {
    %c0 = arith.constant 0 : index
    %c0_0 = arith.constant 0 : index
    %0 = vector.load %arg0[%c0, %c0_0] : memref<16x32xf32, #tpu.memory_space<vmem>>, vector<16x32xf32>
    %c0_1 = arith.constant 0 : index
    %c0_2 = arith.constant 0 : index
    %1 = vector.load %arg7[%c0_1, %c0_2] : memref<1x32xf32, #tpu.memory_space<vmem>>, vector<1x32xf32>
    %2 = arith.mulf %0, %0 : vector<16x32xf32>
    %cst = arith.constant dense<0.000000e+00> : vector<16xf32>
    %3 = vector.multi_reduction <add>, %2, %cst [1] : vector<16x32xf32> to vector<16xf32>
    %4 = vector.shape_cast %3 : vector<16xf32> to vector<16x1xf32>
    %cst_3 = arith.constant 3.200000e+01 : f32
    %5 = vector.broadcast %cst_3 : f32 to vector<16x1xf32>
    %6 = arith.divf %4, %5 : vector<16x1xf32>
    %cst_4 = arith.constant 9.99999997E-7 : f32
    %7 = vector.broadcast %cst_4 : f32 to vector<16x1xf32>
    %8 = arith.addf %6, %7 : vector<16x1xf32>
    %9 = math.rsqrt %8 : vector<16x1xf32>
    %10 = vector.broadcast %9 : vector<16x1xf32> to vector<16x32xf32>
    %11 = arith.mulf %0, %10 : vector<16x32xf32>
    %12 = vector.broadcast %1 : vector<1x32xf32> to vector<16x32xf32>
    %13 = arith.mulf %11, %12 : vector<16x32xf32>
    %14 = vector.shape_cast %13 : vector<16x32xf32> to vector<1x16x32xf32>
    %15 = vector.shape_cast %14 : vector<1x16x32xf32> to vector<1x16x32xf32>
    %16 = vector.broadcast %15 : vector<1x16x32xf32> to vector<4x16x32xf32>
    %c0_5 = arith.constant 0 : index
    %c0_6 = arith.constant 0 : index
    %c0_7 = arith.constant 0 : index
    %17 = vector.load %arg4[%c0_5, %c0_6, %c0_7] : memref<4x32x24xf32, #tpu.memory_space<vmem>>, vector<4x32x24xf32>
    "tpu.trace_start"() <{level = 10 : i32, message = "nth,nhd->ntd"}> : () -> ()
    %cst_8 = arith.constant dense<0.000000e+00> : vector<4x16x24xf32>
    %18 = tpu.matmul %16, %17, %cst_8 {dimension_numbers = #tpu.dot_dimension_numbers<[2], [1], [1], [2], [0, 0, 0, 1, 1, 2], [0], [0]>} : vector<4x16x32xf32>, vector<4x32x24xf32>, vector<4x16x24xf32> -> vector<4x16x24xf32>
    "tpu.trace_stop"() : () -> ()
    %19 = vector.extract_strided_slice %18 {offsets = [0, 0, 0], sizes = [4, 16, 8], strides = [1, 1, 1]} : vector<4x16x24xf32> to vector<4x16x8xf32>
    %20 = vector.extract_strided_slice %18 {offsets = [0, 0, 8], sizes = [4, 16, 8], strides = [1, 1, 1]} : vector<4x16x24xf32> to vector<4x16x8xf32>
    %21 = vector.extract_strided_slice %18 {offsets = [0, 0, 16], sizes = [4, 16, 8], strides = [1, 1, 1]} : vector<4x16x24xf32> to vector<4x16x8xf32>
    %c0_9 = arith.constant 0 : index
    %c0_10 = arith.constant 0 : index
    %22 = vector.load %arg1[%c0_9, %c0_10] : memref<16x8xf32, #tpu.memory_space<vmem>>, vector<16x8xf32>
    %23 = vector.shape_cast %22 : vector<16x8xf32> to vector<1x16x8xf32>
    %c0_11 = arith.constant 0 : index
    %c0_12 = arith.constant 0 : index
    %24 = vector.load %arg2[%c0_11, %c0_12] : memref<16x8xf32, #tpu.memory_space<vmem>>, vector<16x8xf32>
    %25 = vector.shape_cast %24 : vector<16x8xf32> to vector<1x16x8xf32>
    %c0_13 = arith.constant 0 : index
    %c0_14 = arith.constant 0 : index
    %c0_15 = arith.constant 0 : index
    %26 = vector.load %arg5[%c0_13, %c0_14, %c0_15] : memref<4x8x8xf32, #tpu.memory_space<vmem>>, vector<4x8x8xf32>
    %27 = vector.broadcast %23 : vector<1x16x8xf32> to vector<4x16x8xf32>
    %28 = arith.mulf %19, %27 : vector<4x16x8xf32>
    "tpu.trace_start"() <{level = 10 : i32, message = "ntd,nde->nte"}> : () -> ()
    %cst_16 = arith.constant dense<0.000000e+00> : vector<4x16x8xf32>
    %29 = tpu.matmul %19, %26, %cst_16 {dimension_numbers = #tpu.dot_dimension_numbers<[2], [1], [1], [2], [0, 0, 0, 1, 1, 2], [0], [0]>} : vector<4x16x8xf32>, vector<4x8x8xf32>, vector<4x16x8xf32> -> vector<4x16x8xf32>
    "tpu.trace_stop"() : () -> ()
    %30 = vector.broadcast %25 : vector<1x16x8xf32> to vector<4x16x8xf32>
    %31 = arith.mulf %29, %30 : vector<4x16x8xf32>
    %32 = arith.addf %28, %31 : vector<4x16x8xf32>
    %33 = vector.broadcast %23 : vector<1x16x8xf32> to vector<4x16x8xf32>
    %34 = arith.mulf %20, %33 : vector<4x16x8xf32>
    "tpu.trace_start"() <{level = 10 : i32, message = "ntd,nde->nte"}> : () -> ()
    %cst_17 = arith.constant dense<0.000000e+00> : vector<4x16x8xf32>
    %35 = tpu.matmul %20, %26, %cst_17 {dimension_numbers = #tpu.dot_dimension_numbers<[2], [1], [1], [2], [0, 0, 0, 1, 1, 2], [0], [0]>} : vector<4x16x8xf32>, vector<4x8x8xf32>, vector<4x16x8xf32> -> vector<4x16x8xf32>
    "tpu.trace_stop"() : () -> ()
    %36 = vector.broadcast %25 : vector<1x16x8xf32> to vector<4x16x8xf32>
    %37 = arith.mulf %35, %36 : vector<4x16x8xf32>
    %38 = arith.addf %34, %37 : vector<4x16x8xf32>
    "tpu.trace_start"() <{level = 10 : i32, message = "nqd,nkd->nqk"}> : () -> ()
    %cst_18 = arith.constant dense<0.000000e+00> : vector<4x16x16xf32>
    %39 = tpu.matmul %32, %38, %cst_18 {dimension_numbers = #tpu.dot_dimension_numbers<[2], [2], [1], [1], [0, 0, 0, 1, 1, 1], [0], [0]>} : vector<4x16x8xf32>, vector<4x16x8xf32>, vector<4x16x16xf32> -> vector<4x16x16xf32>
    "tpu.trace_stop"() : () -> ()
    %c0_19 = arith.constant 0 : index
    %c0_20 = arith.constant 0 : index
    %40 = vector.load %arg3[%c0_19, %c0_20] : memref<16x16xf32, #tpu.memory_space<vmem>>, vector<16x16xf32>
    %41 = vector.shape_cast %40 : vector<16x16xf32> to vector<1x16x16xf32>
    %42 = vector.broadcast %41 : vector<1x16x16xf32> to vector<4x16x16xf32>
    %43 = arith.addf %39, %42 : vector<4x16x16xf32>
    %cst_21 = arith.constant dense<0xFF800000> : vector<4x16xf32>
    %44 = vector.multi_reduction <maximumf>, %43, %cst_21 [2] : vector<4x16x16xf32> to vector<4x16xf32>
    %45 = vector.shape_cast %44 : vector<4x16xf32> to vector<4x16x1xf32>
    %46 = vector.broadcast %45 : vector<4x16x1xf32> to vector<4x16x16xf32>
    %47 = arith.subf %43, %46 : vector<4x16x16xf32>
    %48 = math.exp %47 : vector<4x16x16xf32>
    %cst_22 = arith.constant dense<0.000000e+00> : vector<4x16xf32>
    %49 = vector.multi_reduction <add>, %48, %cst_22 [2] : vector<4x16x16xf32> to vector<4x16xf32>
    %50 = vector.shape_cast %49 : vector<4x16xf32> to vector<4x16x1xf32>
    %51 = tpu.reciprocal %50 {approx = true} : vector<4x16x1xf32> -> vector<4x16x1xf32>
    %52 = vector.broadcast %51 : vector<4x16x1xf32> to vector<4x16x16xf32>
    %53 = arith.mulf %48, %52 : vector<4x16x16xf32>
    "tpu.trace_start"() <{level = 10 : i32, message = "nqk,nkd->nqd"}> : () -> ()
    %cst_23 = arith.constant dense<0.000000e+00> : vector<4x16x8xf32>
    %54 = tpu.matmul %53, %21, %cst_23 {dimension_numbers = #tpu.dot_dimension_numbers<[2], [1], [1], [2], [0, 0, 0, 1, 1, 2], [0], [0]>} : vector<4x16x16xf32>, vector<4x16x8xf32>, vector<4x16x8xf32> -> vector<4x16x8xf32>
    "tpu.trace_stop"() : () -> ()
    %c0_24 = arith.constant 0 : index
    %c0_25 = arith.constant 0 : index
    %c0_26 = arith.constant 0 : index
    %55 = vector.load %arg6[%c0_24, %c0_25, %c0_26] : memref<4x8x32xf32, #tpu.memory_space<vmem>>, vector<4x8x32xf32>
    "tpu.trace_start"() <{level = 10 : i32, message = "ntd,ndh->nth"}> : () -> ()
    %cst_27 = arith.constant dense<0.000000e+00> : vector<4x16x32xf32>
    %56 = tpu.matmul %54, %55, %cst_27 {dimension_numbers = #tpu.dot_dimension_numbers<[2], [1], [1], [2], [0, 0, 0, 1, 1, 2], [0], [0]>} : vector<4x16x8xf32>, vector<4x8x32xf32>, vector<4x16x32xf32> -> vector<4x16x32xf32>
    "tpu.trace_stop"() : () -> ()
    %cst_28 = arith.constant dense<0.000000e+00> : vector<16x32xf32>
    %57 = vector.multi_reduction <add>, %56, %cst_28 [0] : vector<4x16x32xf32> to vector<16x32xf32>
    %58 = arith.addf %0, %57 : vector<16x32xf32>
    %c0_29 = arith.constant 0 : index
    %c0_30 = arith.constant 0 : index
    %59 = vector.load %arg8[%c0_29, %c0_30] : memref<1x32xf32, #tpu.memory_space<vmem>>, vector<1x32xf32>
    %60 = arith.mulf %58, %58 : vector<16x32xf32>
    %cst_31 = arith.constant dense<0.000000e+00> : vector<16xf32>
    %61 = vector.multi_reduction <add>, %60, %cst_31 [1] : vector<16x32xf32> to vector<16xf32>
    %62 = vector.shape_cast %61 : vector<16xf32> to vector<16x1xf32>
    %cst_32 = arith.constant 3.200000e+01 : f32
    %63 = vector.broadcast %cst_32 : f32 to vector<16x1xf32>
    %64 = arith.divf %62, %63 : vector<16x1xf32>
    %cst_33 = arith.constant 9.99999997E-7 : f32
    %65 = vector.broadcast %cst_33 : f32 to vector<16x1xf32>
    %66 = arith.addf %64, %65 : vector<16x1xf32>
    %67 = math.rsqrt %66 : vector<16x1xf32>
    %68 = vector.broadcast %67 : vector<16x1xf32> to vector<16x32xf32>
    %69 = arith.mulf %58, %68 : vector<16x32xf32>
    %70 = vector.broadcast %59 : vector<1x32xf32> to vector<16x32xf32>
    %71 = arith.mulf %69, %70 : vector<16x32xf32>
    %c0_34 = arith.constant 0 : index
    %c0_35 = arith.constant 0 : index
    %72 = vector.load %arg9[%c0_34, %c0_35] : memref<32x64xf32, #tpu.memory_space<vmem>>, vector<32x64xf32>
    %cst_36 = arith.constant dense<0.000000e+00> : vector<16x64xf32>
    %73 = tpu.matmul %71, %72, %cst_36 {dimension_numbers = #tpu.dot_dimension_numbers<[1], [0], [0], [1], [0, 0, 1, 1], [], []>} : vector<16x32xf32>, vector<32x64xf32>, vector<16x64xf32> -> vector<16x64xf32>
    %74 = arith.mulf %73, %73 : vector<16x64xf32>
    %75 = arith.mulf %73, %74 : vector<16x64xf32>
    %cst_37 = arith.constant 4.471500e-02 : f32
    %76 = vector.broadcast %cst_37 : f32 to vector<16x64xf32>
    %77 = arith.mulf %76, %75 : vector<16x64xf32>
    %78 = arith.addf %73, %77 : vector<16x64xf32>
    %cst_38 = arith.constant 0.797884583 : f32
    %79 = vector.broadcast %cst_38 : f32 to vector<16x64xf32>
    %80 = arith.mulf %79, %78 : vector<16x64xf32>
    %81 = math.tanh %80 : vector<16x64xf32>
    %cst_39 = arith.constant 1.000000e+00 : f32
    %82 = vector.broadcast %cst_39 : f32 to vector<16x64xf32>
    %83 = arith.addf %82, %81 : vector<16x64xf32>
    %cst_40 = arith.constant 5.000000e-01 : f32
    %84 = vector.broadcast %cst_40 : f32 to vector<16x64xf32>
    %85 = arith.mulf %84, %83 : vector<16x64xf32>
    %86 = arith.mulf %73, %85 : vector<16x64xf32>
    %c0_41 = arith.constant 0 : index
    %c0_42 = arith.constant 0 : index
    %87 = vector.load %arg10[%c0_41, %c0_42] : memref<64x32xf32, #tpu.memory_space<vmem>>, vector<64x32xf32>
    %cst_43 = arith.constant dense<0.000000e+00> : vector<16x32xf32>
    %88 = tpu.matmul %86, %87, %cst_43 {dimension_numbers = #tpu.dot_dimension_numbers<[1], [0], [0], [1], [0, 0, 1, 1], [], []>} : vector<16x64xf32>, vector<64x32xf32>, vector<16x32xf32> -> vector<16x32xf32>
    %89 = arith.addf %58, %88 : vector<16x32xf32>
    %c0_44 = arith.constant 0 : index
    %c0_45 = arith.constant 0 : index
    %90 = vector.load %arg11[%c0_44, %c0_45] : memref<16x32xf32, #tpu.memory_space<vmem>>, vector<16x32xf32>
    tpu.vector_store %arg11[%c0_44, %c0_45], %89 {strides = array<i32>} : memref<16x32xf32, #tpu.memory_space<vmem>>, vector<16x32xf32>,
    return
  }
}

</mosaic_0001>

<llo_original>
// kernel: carformer_layer.1
$region0: #{carformer_layer.1}
  #allocation0 [shape = 'u32[]', space=smem, size = 0x4, offset = 0x4, fixed_abs, tag = 'smem constant byte address 0x4 - core index']
  #allocation1 [shape = 'u32[72,128]{1,0:T(1,128)}', space=vmem, size = 0x9000, scoped, tag = 'internal scratch']
  %s0 = inlined_call_operand.vmem [shape: f32[16,32], index: 0, kind: input, shape index: {}]
  %s1 = inlined_call_operand.vmem [shape: f32[16,8], index: 1, kind: input, shape index: {}]
  %s2 = inlined_call_operand.vmem [shape: f32[16,8], index: 2, kind: input, shape index: {}]
  %s3 = inlined_call_operand.vmem [shape: f32[16,16], index: 3, kind: input, shape index: {}]
  %s4 = inlined_call_operand.vmem [shape: f32[4,32,24], index: 4, kind: input, shape index: {}]
  %s5 = inlined_call_operand.vmem [shape: f32[4,8,8], index: 5, kind: input, shape index: {}]
  %s6 = inlined_call_operand.vmem [shape: f32[4,8,32], index: 6, kind: input, shape index: {}]
  %s7 = inlined_call_operand.vmem [shape: f32[1,32], index: 7, kind: input, shape index: {}]
  %s8 = inlined_call_operand.vmem [shape: f32[1,32], index: 8, kind: input, shape index: {}]
  %s9 = inlined_call_operand.vmem [shape: f32[32,64], index: 9, kind: input, shape index: {}]
  %s10 = inlined_call_operand.vmem [shape: f32[64,32], index: 10, kind: input, shape index: {}]
  %s11 = inlined_call_operand.hbm [shape: f32[16,32], index: 11, kind: output, shape index: {}]
  %s12 = sld [smem:[#allocation0]]
  $region54: #{carformer_layer.1} parent=0
    _
  %s14 = ssub.s32 1, %s12
  %s15 = scalar_select 0, %s14, %s12
  $region1: #{carformer_layer.1} parent=0
    #allocation2 [shape = 'u8[8192]{0}', space=vmem, size = 0x2000, scoped, tag = 'output window, operand 0, single buffered']
    #allocation3 [shape = 's32[1]{0}', space=sflag, size = 0x4, scoped, tag = 'scoped memory for carformer_layer.1']
    %16 = vsyncpa [#allocation3], 0
    // Predicated region
    $region2: #{carformer_layer.1} parent=1 // pred_check
      _
    $region3: #{carformer_layer.1} parent=1 // pred_check_branch
      %18 = sbr.rel (0) target = $region5
    $region4: #{carformer_layer.1} parent=1 // pred_region
      _
    $region5: #{carformer_layer.1} parent=1 // pred_fallthru
      _
    // Predicated region
    $region6: #{carformer_layer.1} parent=1 // pred_check
      _
    $region7: #{carformer_layer.1} parent=1 // pred_check_branch
      %20 = sbr.rel (0) target = $region9
    $region8: #{carformer_layer.1} parent=1 // pred_region
      _
    $region9: #{carformer_layer.1} parent=1 // pred_fallthru
      _
    // Predicated region
    $region10: #{carformer_layer.1} parent=1 // pred_check
      _
    $region11: #{carformer_layer.1} parent=1 // pred_check_branch
      %22 = sbr.rel (0) target = $region13
    $region12: #{carformer_layer.1} parent=1 // pred_region
      _
    $region13: #{carformer_layer.1} parent=1 // pred_fallthru
      _
    // Predicated region
    $region14: #{carformer_layer.1} parent=1 // pred_check
      _
    $region15: #{carformer_layer.1} parent=1 // pred_check_branch
      %24 = sbr.rel (0) target = $region17
    $region16: #{carformer_layer.1} parent=1 // pred_region
      _
    $region17: #{carformer_layer.1} parent=1 // pred_fallthru
      _
    // Predicated region
    $region18: #{carformer_layer.1} parent=1 // pred_check
      _
    $region19: #{carformer_layer.1} parent=1 // pred_check_branch
      %26 = sbr.rel (0) target = $region21
    $region20: #{carformer_layer.1} parent=1 // pred_region
      _
    $region21: #{carformer_layer.1} parent=1 // pred_fallthru
      _
    // Predicated region
    $region22: #{carformer_layer.1} parent=1 // pred_check
      _
    $region23: #{carformer_layer.1} parent=1 // pred_check_branch
      %28 = sbr.rel (0) target = $region25
    $region24: #{carformer_layer.1} parent=1 // pred_region
      _
    $region25: #{carformer_layer.1} parent=1 // pred_fallthru
      _
    // Predicated region
    $region26: #{carformer_layer.1} parent=1 // pred_check
      _
    $region27: #{carformer_layer.1} parent=1 // pred_check_branch
      %30 = sbr.rel (0) target = $region29
    $region28: #{carformer_layer.1} parent=1 // pred_region
      _
    $region29: #{carformer_layer.1} parent=1 // pred_fallthru
      _
    // Predicated region
    $region30: #{carformer_layer.1} parent=1 // pred_check
      _
    $region31: #{carformer_layer.1} parent=1 // pred_check_branch
      %32 = sbr.rel (0) target = $region33
    $region32: #{carformer_layer.1} parent=1 // pred_region
      _
    $region33: #{carformer_layer.1} parent=1 // pred_fallthru
      _
    // Predicated region
    $region34: #{carformer_layer.1} parent=1 // pred_check
      _
    $region35: #{carformer_layer.1} parent=1 // pred_check_branch
      %34 = sbr.rel (0) target = $region37
    $region36: #{carformer_layer.1} parent=1 // pred_region
      _
    $region37: #{carformer_layer.1} parent=1 // pred_fallthru
      _
    // Predicated region
    $region38: #{carformer_layer.1} parent=1 // pred_check
      _
    $region39: #{carformer_layer.1} parent=1 // pred_check_branch
      %36 = sbr.rel (0) target = $region41
    $region40: #{carformer_layer.1} parent=1 // pred_region
      _
    $region41: #{carformer_layer.1} parent=1 // pred_fallthru
      _
    // Predicated region
    $region42: #{carformer_layer.1} parent=1 // pred_check
      _
    $region43: #{carformer_layer.1} parent=1 // pred_check_branch
      %38 = sbr.rel (0) target = $region45
    $region44: #{carformer_layer.1} parent=1 // pred_region
      _
    $region45: #{carformer_layer.1} parent=1 // pred_fallthru
      _
    %v39 = vld [vmem:[%s0] sm:$0xff]
    %v40 = vld [vmem:[%s0 + $0x8] sm:$0xff]
    %v41 = vld [vmem:[%s7] sm:$0x1]
    %v42 = vmul.f32 %v39, %v39
    %v43 = vmul.f32 %v40, %v40
    %vm44 = vcmask 261120
    %v45 = vsel %vm44, %v42, 0.0
    %46 = vadd.xlane.f32.xlu0 %v45
    %v47 = vpop.xlane.xlu0 %46
    %v48 = vsel %vm44, %v43, 0.0
    %49 = vadd.xlane.f32.xlu0 %v48
    %v50 = vpop.xlane.xlu0 %49
    %v51 = vrcp.pop 32.0
    %v52 = vmul.f32 32.0, %v51
    %v53 = vsub.f32 1.0, %v52
    %v54 = vmul.f32 %v51, %v53
    %v55 = vadd.f32 %v51, %v54
    %vm56 = vweird.f32 %v51
    %v57 = vsel %vm56, %v51, %v55
    %v58 = vmul.f32 %v47, %v57
    %v59 = vmul.f32 %v50, %v57
    %v60 = vadd.f32 %v58, 1e-06
    %v61 = vadd.f32 %v59, 1e-06
    %v62 = vrsqrt.pop %v60
    %v63 = vmul.f32 %v62, %v60
    %v64 = vmul.f32 %v63, %v62
    %v65 = vmul.f32 0.5, %v64
    %v66 = vsub.f32 1.5, %v65
    %v67 = vmul.f32 %v62, %v66
    %vm68 = vweird.f32 %v60
    %vm69 = vweird.f32 %v62
    %vm70 = vmor %vm68, %vm69
    %v71 = vsel %vm70, %v62, %v67
    %v72 = vrsqrt.pop %v61
    %v73 = vmul.f32 %v72, %v61
    %v74 = vmul.f32 %v73, %v72
    %v75 = vmul.f32 0.5, %v74
    %v76 = vsub.f32 1.5, %v75
    %v77 = vmul.f32 %v72, %v76
    %vm78 = vweird.f32 %v61
    %vm79 = vweird.f32 %v72
    %vm80 = vmor %vm78, %vm79
    %v81 = vsel %vm80, %v72, %v77
    %v82 = vmul.f32 %v39, %v71
    %v83 = vmul.f32 %v40, %v81
    %v85 = vperm.slane %v41, 0
    %v87 = vmul.f32 %v82, %v85
    %v88 = vmul.f32 %v83, %v85
    %v89 = vld [vmem:[%s4] sm:$0xff]
    %v90 = vld [vmem:[%s4 + $0x8] sm:$0xff]
    %v91 = vld [vmem:[%s4 + $0x10] sm:$0xff]
    %v92 = vld [vmem:[%s4 + $0x18] sm:$0xff]
    %v93 = vld [vmem:[%s4 + $0x20] sm:$0xff]
    %v94 = vld [vmem:[%s4 + $0x28] sm:$0xff]
    %v95 = vld [vmem:[%s4 + $0x30] sm:$0xff]
    %v96 = vld [vmem:[%s4 + $0x38] sm:$0xff]
    %v97 = vld [vmem:[%s4 + $0x40] sm:$0xff]
    %v98 = vld [vmem:[%s4 + $0x48] sm:$0xff]
    %v99 = vld [vmem:[%s4 + $0x50] sm:$0xff]
    %v100 = vld [vmem:[%s4 + $0x58] sm:$0xff]
    %v101 = vld [vmem:[%s4 + $0x60] sm:$0xff]
    %v102 = vld [vmem:[%s4 + $0x68] sm:$0xff]
    %v103 = vld [vmem:[%s4 + $0x70] sm:$0xff]
    %v104 = vld [vmem:[%s4 + $0x78] sm:$0xff]
    %v106 = vsel %vm44, %v87, 0
    %v109 = vsel %vm44, %v88, 0
    %111 = vmatpush.msra.mxu0 0.0
    %112 = vmatpush.msra.mxu0 0.0
    %113 = vmatpush.msra.mxu0 0.0
    %114 = vmatpush.msra.mxu0 0.0
    %115 = vmatpush.msra.mxu0 0.0
    %116 = vmatpush.msra.mxu0 0.0
    %117 = vmatpush.msra.mxu0 0.0
    %118 = vmatpush.msra.mxu0 0.0
    %119 = vmatpush.msra.mxu0 0.0
    %120 = vmatpush.msra.mxu0 0.0
    %121 = vmatpush.msra.mxu0 0.0
    %122 = vmatpush.msra.mxu0 0.0
    %123 = vmatpush.msra.mxu0 %v92
    %124 = vmatpush.msra.mxu0 %v91
    %125 = vmatpush.msra.mxu0 %v90
    %126 = vmatpush.msra.mxu0 %v89
    %127 = vmatmul.f32.gmra.mxu0 %v106
    %v128 = vpop.f32.mrf.mxu0
    %v129 = vadd.f32 0.0, %v128
    %130 = vmatmul.f32.gmra.mxu0 %v109
    %v131 = vpop.f32.mrf.mxu0
    %v132 = vadd.f32 0.0, %v131
    %133 = vdwg.mxu0
    %134 = vmatpush.msra.mxu0 0.0
    %135 = vmatpush.msra.mxu0 0.0
    %136 = vmatpush.msra.mxu0 0.0
    %137 = vmatpush.msra.mxu0 0.0
    %138 = vmatpush.msra.mxu0 0.0
    %139 = vmatpush.msra.mxu0 0.0
    %140 = vmatpush.msra.mxu0 0.0
    %141 = vmatpush.msra.mxu0 0.0
    %142 = vmatpush.msra.mxu0 0.0
    %143 = vmatpush.msra.mxu0 0.0
    %144 = vmatpush.msra.mxu0 0.0
    %145 = vmatpush.msra.mxu0 0.0
    %146 = vmatpush.msra.mxu0 %v96
    %147 = vmatpush.msra.mxu0 %v95
    %148 = vmatpush.msra.mxu0 %v94
    %149 = vmatpush.msra.mxu0 %v93
    %150 = vmatmul.f32.gmra.mxu0 %v106
    %v151 = vpop.f32.mrf.mxu0
    %v152 = vadd.f32 0.0, %v151
    %153 = vmatmul.f32.gmra.mxu0 %v109
    %v154 = vpop.f32.mrf.mxu0
    %v155 = vadd.f32 0.0, %v154
    %156 = vdwg.mxu0
    %157 = vmatpush.msra.mxu0 0.0
    %158 = vmatpush.msra.mxu0 0.0
    %159 = vmatpush.msra.mxu0 0.0
    %160 = vmatpush.msra.mxu0 0.0
    %161 = vmatpush.msra.mxu0 0.0
    %162 = vmatpush.msra.mxu0 0.0
    %163 = vmatpush.msra.mxu0 0.0
    %164 = vmatpush.msra.mxu0 0.0
    %165 = vmatpush.msra.mxu0 0.0
    %166 = vmatpush.msra.mxu0 0.0
    %167 = vmatpush.msra.mxu0 0.0
    %168 = vmatpush.msra.mxu0 0.0
    %169 = vmatpush.msra.mxu0 %v100
    %170 = vmatpush.msra.mxu0 %v99
    %171 = vmatpush.msra.mxu0 %v98
    %172 = vmatpush.msra.mxu0 %v97
    %173 = vmatmul.f32.gmra.mxu0 %v106
    %v174 = vpop.f32.mrf.mxu0
    %v175 = vadd.f32 0.0, %v174
    %176 = vmatmul.f32.gmra.mxu0 %v109
    %v177 = vpop.f32.mrf.mxu0
    %v178 = vadd.f32 0.0, %v177
    %179 = vdwg.mxu0
    %180 = vmatpush.msra.mxu0 0.0
    %181 = vmatpush.msra.mxu0 0.0
    %182 = vmatpush.msra.mxu0 0.0
    %183 = vmatpush.msra.mxu0 0.0
    %184 = vmatpush.msra.mxu0 0.0
    %185 = vmatpush.msra.mxu0 0.0
    %186 = vmatpush.msra.mxu0 0.0
    %187 = vmatpush.msra.mxu0 0.0
    %188 = vmatpush.msra.mxu0 0.0
    %189 = vmatpush.msra.mxu0 0.0
    %190 = vmatpush.msra.mxu0 0.0
    %191 = vmatpush.msra.mxu0 0.0
    %192 = vmatpush.msra.mxu0 %v104
    %193 = vmatpush.msra.mxu0 %v103
    %194 = vmatpush.msra.mxu0 %v102
    %195 = vmatpush.msra.mxu0 %v101
    %196 = vmatmul.f32.gmra.mxu0 %v106
    %v197 = vpop.f32.mrf.mxu0
    %v198 = vadd.f32 0.0, %v197
    %199 = vmatmul.f32.gmra.mxu0 %v109
    %v200 = vpop.f32.mrf.mxu0
    %v201 = vadd.f32 0.0, %v200
    %202 = vdwg.mxu0
    %v203 = vld [vmem:[%s1] sm:$0xff]
    %v204 = vld [vmem:[%s1 + $0x8] sm:$0xff]
    %v205 = vld [vmem:[%s2] sm:$0xff]
    %v206 = vld [vmem:[%s2 + $0x8] sm:$0xff]
    %v207 = vld [vmem:[%s5] sm:$0xff]
    %v208 = vld [vmem:[%s5 + $0x8] sm:$0xff]
    %v209 = vld [vmem:[%s5 + $0x10] sm:$0xff]
    %v210 = vld [vmem:[%s5 + $0x18] sm:$0xff]
    %v211 = vmul.f32 %v129, %v203
    %v212 = vmul.f32 %v132, %v204
    %v213 = vmul.f32 %v152, %v203
    %v214 = vmul.f32 %v155, %v204
    %v215 = vmul.f32 %v175, %v203
    %v216 = vmul.f32 %v178, %v204
    %v217 = vmul.f32 %v198, %v203
    %v218 = vmul.f32 %v201, %v204
    %vm219 = vcmask 64512
    %v221 = vsel %vm219, %v129, 0
    %v224 = vsel %vm219, %v132, 0
    %226 = vmatpush.msra.mxu0 0.0
    %227 = vmatpush.msra.mxu0 0.0
    %228 = vmatpush.msra.mxu0 0.0
    %229 = vmatpush.msra.mxu0 0.0
    %230 = vmatpush.msra.mxu0 0.0
    %231 = vmatpush.msra.mxu0 0.0
    %232 = vmatpush.msra.mxu0 0.0
    %233 = vmatpush.msra.mxu0 0.0
    %234 = vmatpush.msra.mxu0 0.0
    %235 = vmatpush.msra.mxu0 0.0
    %236 = vmatpush.msra.mxu0 0.0
    %237 = vmatpush.msra.mxu0 0.0
    %238 = vmatpush.msra.mxu0 0.0
    %239 = vmatpush.msra.mxu0 0.0
    %240 = vmatpush.msra.mxu0 0.0
    %241 = vmatpush.msra.mxu0 %v207
    %242 = vmatmul.f32.gmra.mxu0 %v221
    %v243 = vpop.f32.mrf.mxu0
    %v244 = vadd.f32 0.0, %v243
    %245 = vmatmul.f32.gmra.mxu0 %v224
    %v246 = vpop.f32.mrf.mxu0
    %v247 = vadd.f32 0.0, %v246
    %248 = vdwg.mxu0
    %v250 = vsel %vm219, %v152, 0
    %v253 = vsel %vm219, %v155, 0
    %255 = vmatpush.msra.mxu0 0.0
    %256 = vmatpush.msra.mxu0 0.0
    %257 = vmatpush.msra.mxu0 0.0
    %258 = vmatpush.msra.mxu0 0.0
    %259 = vmatpush.msra.mxu0 0.0
    %260 = vmatpush.msra.mxu0 0.0
    %261 = vmatpush.msra.mxu0 0.0
    %262 = vmatpush.msra.mxu0 0.0
    %263 = vmatpush.msra.mxu0 0.0
    %264 = vmatpush.msra.mxu0 0.0
    %265 = vmatpush.msra.mxu0 0.0
    %266 = vmatpush.msra.mxu0 0.0
    %267 = vmatpush.msra.mxu0 0.0
    %268 = vmatpush.msra.mxu0 0.0
    %269 = vmatpush.msra.mxu0 0.0
    %270 = vmatpush.msra.mxu0 %v208
    %271 = vmatmul.f32.gmra.mxu0 %v250
    %v272 = vpop.f32.mrf.mxu0
    %v273 = vadd.f32 0.0, %v272
    %274 = vmatmul.f32.gmra.mxu0 %v253
    %v275 = vpop.f32.mrf.mxu0
    %v276 = vadd.f32 0.0, %v275
    %277 = vdwg.mxu0
    %v279 = vsel %vm219, %v175, 0
    %v282 = vsel %vm219, %v178, 0
    %284 = vmatpush.msra.mxu0 0.0
    %285 = vmatpush.msra.mxu0 0.0
    %286 = vmatpush.msra.mxu0 0.0
    %287 = vmatpush.msra.mxu0 0.0
    %288 = vmatpush.msra.mxu0 0.0
    %289 = vmatpush.msra.mxu0 0.0
    %290 = vmatpush.msra.mxu0 0.0
    %291 = vmatpush.msra.mxu0 0.0
    %292 = vmatpush.msra.mxu0 0.0
    %293 = vmatpush.msra.mxu0 0.0
    %294 = vmatpush.msra.mxu0 0.0
    %295 = vmatpush.msra.mxu0 0.0
    %296 = vmatpush.msra.mxu0 0.0
    %297 = vmatpush.msra.mxu0 0.0
    %298 = vmatpush.msra.mxu0 0.0
    %299 = vmatpush.msra.mxu0 %v209
    %300 = vmatmul.f32.gmra.mxu0 %v279
    %v301 = vpop.f32.mrf.mxu0
    %v302 = vadd.f32 0.0, %v301
    %303 = vmatmul.f32.gmra.mxu0 %v282
    %v304 = vpop.f32.mrf.mxu0
    %v305 = vadd.f32 0.0, %v304
    %306 = vdwg.mxu0
    %v308 = vsel %vm219, %v198, 0
    %v311 = vsel %vm219, %v201, 0
    %313 = vmatpush.msra.mxu0 0.0
    %314 = vmatpush.msra.mxu0 0.0
    %315 = vmatpush.msra.mxu0 0.0
    %316 = vmatpush.msra.mxu0 0.0
    %317 = vmatpush.msra.mxu0 0.0
    %318 = vmatpush.msra.mxu0 0.0
    %319 = vmatpush.msra.mxu0 0.0
    %320 = vmatpush.msra.mxu0 0.0
    %321 = vmatpush.msra.mxu0 0.0
    %322 = vmatpush.msra.mxu0 0.0
    %323 = vmatpush.msra.mxu0 0.0
    %324 = vmatpush.msra.mxu0 0.0
    %325 = vmatpush.msra.mxu0 0.0
    %326 = vmatpush.msra.mxu0 0.0
    %327 = vmatpush.msra.mxu0 0.0
    %328 = vmatpush.msra.mxu0 %v210
    %329 = vmatmul.f32.gmra.mxu0 %v308
    %v330 = vpop.f32.mrf.mxu0
    %v331 = vadd.f32 0.0, %v330
    %332 = vmatmul.f32.gmra.mxu0 %v311
    %v333 = vpop.f32.mrf.mxu0
    %v334 = vadd.f32 0.0, %v333
    %335 = vdwg.mxu0
    %v336 = vmul.f32 %v244, %v205
    %v337 = vmul.f32 %v247, %v206
    %v338 = vmul.f32 %v273, %v205
    %v339 = vmul.f32 %v276, %v206
    %v340 = vmul.f32 %v302, %v205
    %v341 = vmul.f32 %v305, %v206
    %v342 = vmul.f32 %v331, %v205
    %v343 = vmul.f32 %v334, %v206
    %v344 = vadd.f32 %v211, %v336
    %v345 = vadd.f32 %v212, %v337
    %v346 = vadd.f32 %v213, %v338
    %v347 = vadd.f32 %v214, %v339
    %v348 = vadd.f32 %v215, %v340
    %v349 = vadd.f32 %v216, %v341
    %v350 = vadd.f32 %v217, %v342
    %v351 = vadd.f32 %v218, %v343
    %354 = vrot.lane.b32.xlu0 %v203, 8
    %v355 = vpop.permute.xlu0 %354
    %356 = vrot.lane.b32.xlu0 %v204, 8
    %v357 = vpop.permute.xlu0 %356
    %v360 = vmul.f32 %v129, %v355
    %v361 = vmul.f32 %v132, %v357
    %v362 = vmul.f32 %v152, %v355
    %v363 = vmul.f32 %v155, %v357
    %v364 = vmul.f32 %v175, %v355
    %v365 = vmul.f32 %v178, %v357
    %v366 = vmul.f32 %v198, %v355
    %v367 = vmul.f32 %v201, %v357
    %368 = vrot.lane.b32.xlu0 %v129, 120
    %v369 = vpop.permute.xlu0 %368
    %370 = vrot.lane.b32.xlu0 %v132, 120
    %v371 = vpop.permute.xlu0 %370
    %v372 = vsel %vm219, %v369, 0
    %v374 = vsel %vm219, %v371, 0
    %376 = vmatpush.msra.mxu0 0.0
    %377 = vmatpush.msra.mxu0 0.0
    %378 = vmatpush.msra.mxu0 0.0
    %379 = vmatpush.msra.mxu0 0.0
    %380 = vmatpush.msra.mxu0 0.0
    %381 = vmatpush.msra.mxu0 0.0
    %382 = vmatpush.msra.mxu0 0.0
    %383 = vmatpush.msra.mxu0 0.0
    %384 = vmatpush.msra.mxu0 0.0
    %385 = vmatpush.msra.mxu0 0.0
    %386 = vmatpush.msra.mxu0 0.0
    %387 = vmatpush.msra.mxu0 0.0
    %388 = vmatpush.msra.mxu0 0.0
    %389 = vmatpush.msra.mxu0 0.0
    %390 = vmatpush.msra.mxu0 0.0
    %391 = vmatpush.msra.mxu0 %v207
    %392 = vmatmul.f32.gmra.mxu0 %v372
    %v393 = vpop.f32.mrf.mxu0
    %v394 = vadd.f32 0.0, %v393
    %395 = vmatmul.f32.gmra.mxu0 %v374
    %v396 = vpop.f32.mrf.mxu0
    %v397 = vadd.f32 0.0, %v396
    %398 = vdwg.mxu0
    %399 = vrot.lane.b32.xlu0 %v152, 120
    %v400 = vpop.permute.xlu0 %399
    %401 = vrot.lane.b32.xlu0 %v155, 120
    %v402 = vpop.permute.xlu0 %401
    %v403 = vsel %vm219, %v400, 0
    %v405 = vsel %vm219, %v402, 0
    %407 = vmatpush.msra.mxu0 0.0
    %408 = vmatpush.msra.mxu0 0.0
    %409 = vmatpush.msra.mxu0 0.0
    %410 = vmatpush.msra.mxu0 0.0
    %411 = vmatpush.msra.mxu0 0.0
    %412 = vmatpush.msra.mxu0 0.0
    %413 = vmatpush.msra.mxu0 0.0
    %414 = vmatpush.msra.mxu0 0.0
    %415 = vmatpush.msra.mxu0 0.0
    %416 = vmatpush.msra.mxu0 0.0
    %417 = vmatpush.msra.mxu0 0.0
    %418 = vmatpush.msra.mxu0 0.0
    %419 = vmatpush.msra.mxu0 0.0
    %420 = vmatpush.msra.mxu0 0.0
    %421 = vmatpush.msra.mxu0 0.0
    %422 = vmatpush.msra.mxu0 %v208
    %423 = vmatmul.f32.gmra.mxu0 %v403
    %v424 = vpop.f32.mrf.mxu0
    %v425 = vadd.f32 0.0, %v424
    %426 = vmatmul.f32.gmra.mxu0 %v405
    %v427 = vpop.f32.mrf.mxu0
    %v428 = vadd.f32 0.0, %v427
    %429 = vdwg.mxu0
    %430 = vrot.lane.b32.xlu0 %v175, 120
    %v431 = vpop.permute.xlu0 %430
    %432 = vrot.lane.b32.xlu0 %v178, 120
    %v433 = vpop.permute.xlu0 %432
    %v434 = vsel %vm219, %v431, 0
    %v436 = vsel %vm219, %v433, 0
    %438 = vmatpush.msra.mxu0 0.0
    %439 = vmatpush.msra.mxu0 0.0
    %440 = vmatpush.msra.mxu0 0.0
    %441 = vmatpush.msra.mxu0 0.0
    %442 = vmatpush.msra.mxu0 0.0
    %443 = vmatpush.msra.mxu0 0.0
    %444 = vmatpush.msra.mxu0 0.0
    %445 = vmatpush.msra.mxu0 0.0
    %446 = vmatpush.msra.mxu0 0.0
    %447 = vmatpush.msra.mxu0 0.0
    %448 = vmatpush.msra.mxu0 0.0
    %449 = vmatpush.msra.mxu0 0.0
    %450 = vmatpush.msra.mxu0 0.0
    %451 = vmatpush.msra.mxu0 0.0
    %452 = vmatpush.msra.mxu0 0.0
    %453 = vmatpush.msra.mxu0 %v209
    %454 = vmatmul.f32.gmra.mxu0 %v434
    %v455 = vpop.f32.mrf.mxu0
    %v456 = vadd.f32 0.0, %v455
    %457 = vmatmul.f32.gmra.mxu0 %v436
    %v458 = vpop.f32.mrf.mxu0
    %v459 = vadd.f32 0.0, %v458
    %460 = vdwg.mxu0
    %461 = vrot.lane.b32.xlu0 %v198, 120
    %v462 = vpop.permute.xlu0 %461
    %463 = vrot.lane.b32.xlu0 %v201, 120
    %v464 = vpop.permute.xlu0 %463
    %v465 = vsel %vm219, %v462, 0
    %v467 = vsel %vm219, %v464, 0
    %469 = vmatpush.msra.mxu0 0.0
    %470 = vmatpush.msra.mxu0 0.0
    %471 = vmatpush.msra.mxu0 0.0
    %472 = vmatpush.msra.mxu0 0.0
    %473 = vmatpush.msra.mxu0 0.0
    %474 = vmatpush.msra.mxu0 0.0
    %475 = vmatpush.msra.mxu0 0.0
    %476 = vmatpush.msra.mxu0 0.0
    %477 = vmatpush.msra.mxu0 0.0
    %478 = vmatpush.msra.mxu0 0.0
    %479 = vmatpush.msra.mxu0 0.0
    %480 = vmatpush.msra.mxu0 0.0
    %481 = vmatpush.msra.mxu0 0.0
    %482 = vmatpush.msra.mxu0 0.0
    %483 = vmatpush.msra.mxu0 0.0
    %484 = vmatpush.msra.mxu0 %v210
    %485 = vmatmul.f32.gmra.mxu0 %v465
    %v486 = vpop.f32.mrf.mxu0
    %v487 = vadd.f32 0.0, %v486
    %488 = vmatmul.f32.gmra.mxu0 %v467
    %v489 = vpop.f32.mrf.mxu0
    %v490 = vadd.f32 0.0, %v489
    %491 = vdwg.mxu0
    %v492 = vmul.f32 %v394, %v205
    %v493 = vmul.f32 %v397, %v206
    %v494 = vmul.f32 %v425, %v205
    %v495 = vmul.f32 %v428, %v206
    %v496 = vmul.f32 %v456, %v205
    %v497 = vmul.f32 %v459, %v206
    %v498 = vmul.f32 %v487, %v205
    %v499 = vmul.f32 %v490, %v206
    %508 = vrot.lane.b32.xlu0 %v492, 8
    %v509 = vpop.permute.xlu0 %508
    %510 = vrot.lane.b32.xlu0 %v493, 8
    %v511 = vpop.permute.xlu0 %510
    %512 = vrot.lane.b32.xlu0 %v494, 8
    %v513 = vpop.permute.xlu0 %512
    %514 = vrot.lane.b32.xlu0 %v495, 8
    %v515 = vpop.permute.xlu0 %514
    %516 = vrot.lane.b32.xlu0 %v496, 8
    %v517 = vpop.permute.xlu0 %516
    %518 = vrot.lane.b32.xlu0 %v497, 8
    %v519 = vpop.permute.xlu0 %518
    %520 = vrot.lane.b32.xlu0 %v498, 8
    %v521 = vpop.permute.xlu0 %520
    %522 = vrot.lane.b32.xlu0 %v499, 8
    %v523 = vpop.permute.xlu0 %522
    %v532 = vadd.f32 %v360, %v509
    %v533 = vadd.f32 %v361, %v511
    %v534 = vadd.f32 %v362, %v513
    %v535 = vadd.f32 %v363, %v515
    %v536 = vadd.f32 %v364, %v517
    %v537 = vadd.f32 %v365, %v519
    %v538 = vadd.f32 %v366, %v521
    %v539 = vadd.f32 %v367, %v523
    %v540 = vld [vmem:[%s3] sm:$0xff]
    %v541 = vld [vmem:[%s3 + $0x8] sm:$0xff]
    %544 = vrot.lane.b32.xlu0 %v532, 120
    %v545 = vpop.permute.xlu0 %544
    %546 = vrot.lane.b32.xlu0 %v533, 120
    %v547 = vpop.permute.xlu0 %546
    %v549 = vsel %vm219, %v344, 0
    %v552 = vsel %vm219, %v345, 0
    %v554 = vsel %vm219, %v545, 0
    %v556 = vsel %vm219, %v547, 0
    %558 = vmatpush.xpose.msra.mxu0 0.0
    %559 = vmatpush.xpose.msra.mxu0 0.0
    %560 = vmatpush.xpose.msra.mxu0 0.0
    %561 = vmatpush.xpose.msra.mxu0 0.0
    %562 = vmatpush.xpose.msra.mxu0 0.0
    %563 = vmatpush.xpose.msra.mxu0 0.0
    %564 = vmatpush.xpose.msra.mxu0 0.0
    %565 = vmatpush.xpose.msra.mxu0 0.0
    %566 = vmatpush.xpose.msra.mxu0 0.0
    %567 = vmatpush.xpose.msra.mxu0 0.0
    %568 = vmatpush.xpose.msra.mxu0 0.0
    %569 = vmatpush.xpose.msra.mxu0 0.0
    %570 = vmatpush.xpose.msra.mxu0 0.0
    %571 = vmatpush.xpose.msra.mxu0 0.0
    %572 = vmatpush.xpose.msra.mxu0 %v556
    %573 = vmatpush.xpose.msra.mxu0 %v554
    %574 = vmatmul.f32.gmra.mxu0 %v549
    %v575 = vpop.f32.mrf.mxu0
    %v576 = vadd.f32 %v540, %v575
    %577 = vmatmul.f32.gmra.mxu0 %v552
    %v578 = vpop.f32.mrf.mxu0
    %v579 = vadd.f32 %v541, %v578
    %580 = vdwg.mxu0
    %583 = vrot.lane.b32.xlu0 %v534, 120
    %v584 = vpop.permute.xlu0 %583
    %585 = vrot.lane.b32.xlu0 %v535, 120
    %v586 = vpop.permute.xlu0 %585
    %v588 = vsel %vm219, %v346, 0
    %v591 = vsel %vm219, %v347, 0
    %v593 = vsel %vm219, %v584, 0
    %v595 = vsel %vm219, %v586, 0
    %597 = vmatpush.xpose.msra.mxu0 0.0
    %598 = vmatpush.xpose.msra.mxu0 0.0
    %599 = vmatpush.xpose.msra.mxu0 0.0
    %600 = vmatpush.xpose.msra.mxu0 0.0
    %601 = vmatpush.xpose.msra.mxu0 0.0
    %602 = vmatpush.xpose.msra.mxu0 0.0
    %603 = vmatpush.xpose.msra.mxu0 0.0
    %604 = vmatpush.xpose.msra.mxu0 0.0
    %605 = vmatpush.xpose.msra.mxu0 0.0
    %606 = vmatpush.xpose.msra.mxu0 0.0
    %607 = vmatpush.xpose.msra.mxu0 0.0
    %608 = vmatpush.xpose.msra.mxu0 0.0
    %609 = vmatpush.xpose.msra.mxu0 0.0
    %610 = vmatpush.xpose.msra.mxu0 0.0
    %611 = vmatpush.xpose.msra.mxu0 %v595
    %612 = vmatpush.xpose.msra.mxu0 %v593
    %613 = vmatmul.f32.gmra.mxu0 %v588
    %v614 = vpop.f32.mrf.mxu0
    %v615 = vadd.f32 %v540, %v614
    %616 = vmatmul.f32.gmra.mxu0 %v591
    %v617 = vpop.f32.mrf.mxu0
    %v618 = vadd.f32 %v541, %v617
    %619 = vdwg.mxu0
    %622 = vrot.lane.b32.xlu0 %v536, 120
    %v623 = vpop.permute.xlu0 %622
    %624 = vrot.lane.b32.xlu0 %v537, 120
    %v625 = vpop.permute.xlu0 %624
    %v627 = vsel %vm219, %v348, 0
    %v630 = vsel %vm219, %v349, 0
    %v632 = vsel %vm219, %v623, 0
    %v634 = vsel %vm219, %v625, 0
    %636 = vmatpush.xpose.msra.mxu0 0.0
    %637 = vmatpush.xpose.msra.mxu0 0.0
    %638 = vmatpush.xpose.msra.mxu0 0.0
    %639 = vmatpush.xpose.msra.mxu0 0.0
    %640 = vmatpush.xpose.msra.mxu0 0.0
    %641 = vmatpush.xpose.msra.mxu0 0.0
    %642 = vmatpush.xpose.msra.mxu0 0.0
    %643 = vmatpush.xpose.msra.mxu0 0.0
    %644 = vmatpush.xpose.msra.mxu0 0.0
    %645 = vmatpush.xpose.msra.mxu0 0.0
    %646 = vmatpush.xpose.msra.mxu0 0.0
    %647 = vmatpush.xpose.msra.mxu0 0.0
    %648 = vmatpush.xpose.msra.mxu0 0.0
    %649 = vmatpush.xpose.msra.mxu0 0.0
    %650 = vmatpush.xpose.msra.mxu0 %v634
    %651 = vmatpush.xpose.msra.mxu0 %v632
    %652 = vmatmul.f32.gmra.mxu0 %v627
    %v653 = vpop.f32.mrf.mxu0
    %v654 = vadd.f32 %v540, %v653
    %655 = vmatmul.f32.gmra.mxu0 %v630
    %v656 = vpop.f32.mrf.mxu0
    %v657 = vadd.f32 %v541, %v656
    %658 = vdwg.mxu0
    %661 = vrot.lane.b32.xlu0 %v538, 120
    %v662 = vpop.permute.xlu0 %661
    %663 = vrot.lane.b32.xlu0 %v539, 120
    %v664 = vpop.permute.xlu0 %663
    %v666 = vsel %vm219, %v350, 0
    %v669 = vsel %vm219, %v351, 0
    %v671 = vsel %vm219, %v662, 0
    %v673 = vsel %vm219, %v664, 0
    %675 = vmatpush.xpose.msra.mxu0 0.0
    %676 = vmatpush.xpose.msra.mxu0 0.0
    %677 = vmatpush.xpose.msra.mxu0 0.0
    %678 = vmatpush.xpose.msra.mxu0 0.0
    %679 = vmatpush.xpose.msra.mxu0 0.0
    %680 = vmatpush.xpose.msra.mxu0 0.0
    %681 = vmatpush.xpose.msra.mxu0 0.0
    %682 = vmatpush.xpose.msra.mxu0 0.0
    %683 = vmatpush.xpose.msra.mxu0 0.0
    %684 = vmatpush.xpose.msra.mxu0 0.0
    %685 = vmatpush.xpose.msra.mxu0 0.0
    %686 = vmatpush.xpose.msra.mxu0 0.0
    %687 = vmatpush.xpose.msra.mxu0 0.0
    %688 = vmatpush.xpose.msra.mxu0 0.0
    %689 = vmatpush.xpose.msra.mxu0 %v673
    %690 = vmatpush.xpose.msra.mxu0 %v671
    %691 = vmatmul.f32.gmra.mxu0 %v666
    %v692 = vpop.f32.mrf.mxu0
    %v693 = vadd.f32 %v540, %v692
    %694 = vmatmul.f32.gmra.mxu0 %v669
    %v695 = vpop.f32.mrf.mxu0
    %v696 = vadd.f32 %v541, %v695
    %697 = vdwg.mxu0
    %vm698 = vcmask 130048
    %v699 = vsel %vm698, %v576, -inf
    %700 = vmax.xlane.f32.xlu0 %v699
    %v701 = vpop.xlane.xlu0 %700
    %v702 = vsel %vm698, %v579, -inf
    %703 = vmax.xlane.f32.xlu0 %v702
    %v704 = vpop.xlane.xlu0 %703
    %v705 = vsel %vm698, %v615, -inf
    %706 = vmax.xlane.f32.xlu0 %v705
    %v707 = vpop.xlane.xlu0 %706
    %v708 = vsel %vm698, %v618, -inf
    %709 = vmax.xlane.f32.xlu0 %v708
    %v710 = vpop.xlane.xlu0 %709
    %v711 = vsel %vm698, %v654, -inf
    %712 = vmax.xlane.f32.xlu0 %v711
    %v713 = vpop.xlane.xlu0 %712
    %v714 = vsel %vm698, %v657, -inf
    %715 = vmax.xlane.f32.xlu0 %v714
    %v716 = vpop.xlane.xlu0 %715
    %v717 = vsel %vm698, %v693, -inf
    %718 = vmax.xlane.f32.xlu0 %v717
    %v719 = vpop.xlane.xlu0 %718
    %v720 = vsel %vm698, %v696, -inf
    %721 = vmax.xlane.f32.xlu0 %v720
    %v722 = vpop.xlane.xlu0 %721
    %v723 = vsub.f32 %v576, %v701
    %v724 = vsub.f32 %v579, %v704
    %v725 = vsub.f32 %v615, %v707
    %v726 = vsub.f32 %v618, %v710
    %v727 = vsub.f32 %v654, %v713
    %v728 = vsub.f32 %v657, %v716
    %v729 = vsub.f32 %v693, %v719
    %v730 = vsub.f32 %v696, %v722
    %v731 = vmul.f32 %v723, 1.442695
    %v732 = vpow.pop %v731
    %v733 = vmul.f32 %v724, 1.442695
    %v734 = vpow.pop %v733
    %v735 = vmul.f32 %v725, 1.442695
    %v736 = vpow.pop %v735
    %v737 = vmul.f32 %v726, 1.442695
    %v738 = vpow.pop %v737
    %v739 = vmul.f32 %v727, 1.442695
    %v740 = vpow.pop %v739
    %v741 = vmul.f32 %v728, 1.442695
    %v742 = vpow.pop %v741
    %v743 = vmul.f32 %v729, 1.442695
    %v744 = vpow.pop %v743
    %v745 = vmul.f32 %v730, 1.442695
    %v746 = vpow.pop %v745
    %v747 = vsel %vm698, %v732, 0.0
    %748 = vadd.xlane.f32.xlu0 %v747
    %v749 = vpop.xlane.xlu0 %748
    %v750 = vsel %vm698, %v734, 0.0
    %751 = vadd.xlane.f32.xlu0 %v750
    %v752 = vpop.xlane.xlu0 %751
    %v753 = vsel %vm698, %v736, 0.0
    %754 = vadd.xlane.f32.xlu0 %v753
    %v755 = vpop.xlane.xlu0 %754
    %v756 = vsel %vm698, %v738, 0.0
    %757 = vadd.xlane.f32.xlu0 %v756
    %v758 = vpop.xlane.xlu0 %757
    %v759 = vsel %vm698, %v740, 0.0
    %760 = vadd.xlane.f32.xlu0 %v759
    %v761 = vpop.xlane.xlu0 %760
    %v762 = vsel %vm698, %v742, 0.0
    %763 = vadd.xlane.f32.xlu0 %v762
    %v764 = vpop.xlane.xlu0 %763
    %v765 = vsel %vm698, %v744, 0.0
    %766 = vadd.xlane.f32.xlu0 %v765
    %v767 = vpop.xlane.xlu0 %766
    %v768 = vsel %vm698, %v746, 0.0
    %769 = vadd.xlane.f32.xlu0 %v768
    %v770 = vpop.xlane.xlu0 %769
    %v771 = vrcp.pop %v749
    %v772 = vrcp.pop %v752
    %v773 = vrcp.pop %v755
    %v774 = vrcp.pop %v758
    %v775 = vrcp.pop %v761
    %v776 = vrcp.pop %v764
    %v777 = vrcp.pop %v767
    %v778 = vrcp.pop %v770
    %v779 = vmul.f32 %v732, %v771
    %v780 = vmul.f32 %v734, %v772
    %v781 = vmul.f32 %v736, %v773
    %v782 = vmul.f32 %v738, %v774
    %v783 = vmul.f32 %v740, %v775
    %v784 = vmul.f32 %v742, %v776
    %v785 = vmul.f32 %v744, %v777
    %v786 = vmul.f32 %v746, %v778
    %787 = vrot.lane.b32.xlu0 %v129, 112
    %v788 = vpop.permute.xlu0 %787
    %789 = vrot.lane.b32.xlu0 %v132, 112
    %v790 = vpop.permute.xlu0 %789
    %v794 = vsel %vm698, %v779, 0
    %v797 = vsel %vm698, %v780, 0
    %799 = vmatpush.msra.mxu0 0.0
    %800 = vmatpush.msra.mxu0 0.0
    %801 = vmatpush.msra.mxu0 0.0
    %802 = vmatpush.msra.mxu0 0.0
    %803 = vmatpush.msra.mxu0 0.0
    %804 = vmatpush.msra.mxu0 0.0
    %805 = vmatpush.msra.mxu0 0.0
    %806 = vmatpush.msra.mxu0 0.0
    %807 = vmatpush.msra.mxu0 0.0
    %808 = vmatpush.msra.mxu0 0.0
    %809 = vmatpush.msra.mxu0 0.0
    %810 = vmatpush.msra.mxu0 0.0
    %811 = vmatpush.msra.mxu0 0.0
    %812 = vmatpush.msra.mxu0 0.0
    %813 = vmatpush.msra.mxu0 %v790
    %814 = vmatpush.msra.mxu0 %v788
    %815 = vmatmul.f32.gmra.mxu0 %v794
    %v816 = vpop.f32.mrf.mxu0
    %v817 = vadd.f32 0.0, %v816
    %818 = vmatmul.f32.gmra.mxu0 %v797
    %v819 = vpop.f32.mrf.mxu0
    %v820 = vadd.f32 0.0, %v819
    %821 = vdwg.mxu0
    %822 = vrot.lane.b32.xlu0 %v152, 112
    %v823 = vpop.permute.xlu0 %822
    %824 = vrot.lane.b32.xlu0 %v155, 112
    %v825 = vpop.permute.xlu0 %824
    %v829 = vsel %vm698, %v781, 0
    %v832 = vsel %vm698, %v782, 0
    %834 = vmatpush.msra.mxu0 0.0
    %835 = vmatpush.msra.mxu0 0.0
    %836 = vmatpush.msra.mxu0 0.0
    %837 = vmatpush.msra.mxu0 0.0
    %838 = vmatpush.msra.mxu0 0.0
    %839 = vmatpush.msra.mxu0 0.0
    %840 = vmatpush.msra.mxu0 0.0
    %841 = vmatpush.msra.mxu0 0.0
    %842 = vmatpush.msra.mxu0 0.0
    %843 = vmatpush.msra.mxu0 0.0
    %844 = vmatpush.msra.mxu0 0.0
    %845 = vmatpush.msra.mxu0 0.0
    %846 = vmatpush.msra.mxu0 0.0
    %847 = vmatpush.msra.mxu0 0.0
    %848 = vmatpush.msra.mxu0 %v825
    %849 = vmatpush.msra.mxu0 %v823
    %850 = vmatmul.f32.gmra.mxu0 %v829
    %v851 = vpop.f32.mrf.mxu0
    %v852 = vadd.f32 0.0, %v851
    %853 = vmatmul.f32.gmra.mxu0 %v832
    %v854 = vpop.f32.mrf.mxu0
    %v855 = vadd.f32 0.0, %v854
    %856 = vdwg.mxu0
    %857 = vrot.lane.b32.xlu0 %v175, 112
    %v858 = vpop.permute.xlu0 %857
    %859 = vrot.lane.b32.xlu0 %v178, 112
    %v860 = vpop.permute.xlu0 %859
    %v864 = vsel %vm698, %v783, 0
    %v867 = vsel %vm698, %v784, 0
    %869 = vmatpush.msra.mxu0 0.0
    %870 = vmatpush.msra.mxu0 0.0
    %871 = vmatpush.msra.mxu0 0.0
    %872 = vmatpush.msra.mxu0 0.0
    %873 = vmatpush.msra.mxu0 0.0
    %874 = vmatpush.msra.mxu0 0.0
    %875 = vmatpush.msra.mxu0 0.0
    %876 = vmatpush.msra.mxu0 0.0
    %877 = vmatpush.msra.mxu0 0.0
    %878 = vmatpush.msra.mxu0 0.0
    %879 = vmatpush.msra.mxu0 0.0
    %880 = vmatpush.msra.mxu0 0.0
    %881 = vmatpush.msra.mxu0 0.0
    %882 = vmatpush.msra.mxu0 0.0
    %883 = vmatpush.msra.mxu0 %v860
    %884 = vmatpush.msra.mxu0 %v858
    %885 = vmatmul.f32.gmra.mxu0 %v864
    %v886 = vpop.f32.mrf.mxu0
    %v887 = vadd.f32 0.0, %v886
    %888 = vmatmul.f32.gmra.mxu0 %v867
    %v889 = vpop.f32.mrf.mxu0
    %v890 = vadd.f32 0.0, %v889
    %891 = vdwg.mxu0
    %892 = vrot.lane.b32.xlu0 %v198, 112
    %v893 = vpop.permute.xlu0 %892
    %894 = vrot.lane.b32.xlu0 %v201, 112
    %v895 = vpop.permute.xlu0 %894
    %v899 = vsel %vm698, %v785, 0
    %v902 = vsel %vm698, %v786, 0
    %904 = vmatpush.msra.mxu0 0.0
    %905 = vmatpush.msra.mxu0 0.0
    %906 = vmatpush.msra.mxu0 0.0
    %907 = vmatpush.msra.mxu0 0.0
    %908 = vmatpush.msra.mxu0 0.0
    %909 = vmatpush.msra.mxu0 0.0
    %910 = vmatpush.msra.mxu0 0.0
    %911 = vmatpush.msra.mxu0 0.0
    %912 = vmatpush.msra.mxu0 0.0
    %913 = vmatpush.msra.mxu0 0.0
    %914 = vmatpush.msra.mxu0 0.0
    %915 = vmatpush.msra.mxu0 0.0
    %916 = vmatpush.msra.mxu0 0.0
    %917 = vmatpush.msra.mxu0 0.0
    %918 = vmatpush.msra.mxu0 %v895
    %919 = vmatpush.msra.mxu0 %v893
    %920 = vmatmul.f32.gmra.mxu0 %v899
    %v921 = vpop.f32.mrf.mxu0
    %v922 = vadd.f32 0.0, %v921
    %923 = vmatmul.f32.gmra.mxu0 %v902
    %v924 = vpop.f32.mrf.mxu0
    %v925 = vadd.f32 0.0, %v924
    %926 = vdwg.mxu0
    %v927 = vld [vmem:[%s6] sm:$0xff]
    %v928 = vld [vmem:[%s6 + $0x8] sm:$0xff]
    %v929 = vld [vmem:[%s6 + $0x10] sm:$0xff]
    %v930 = vld [vmem:[%s6 + $0x18] sm:$0xff]
    %v932 = vsel %vm219, %v817, 0
    %v935 = vsel %vm219, %v820, 0
    %937 = vmatpush.msra.mxu0 0.0
    %938 = vmatpush.msra.mxu0 0.0
    %939 = vmatpush.msra.mxu0 0.0
    %940 = vmatpush.msra.mxu0 0.0
    %941 = vmatpush.msra.mxu0 0.0
    %942 = vmatpush.msra.mxu0 0.0
    %943 = vmatpush.msra.mxu0 0.0
    %944 = vmatpush.msra.mxu0 0.0
    %945 = vmatpush.msra.mxu0 0.0
    %946 = vmatpush.msra.mxu0 0.0
    %947 = vmatpush.msra.mxu0 0.0
    %948 = vmatpush.msra.mxu0 0.0
    %949 = vmatpush.msra.mxu0 0.0
    %950 = vmatpush.msra.mxu0 0.0
    %951 = vmatpush.msra.mxu0 0.0
    %952 = vmatpush.msra.mxu0 %v927
    %953 = vmatmul.f32.gmra.mxu0 %v932
    %v954 = vpop.f32.mrf.mxu0
    %v955 = vadd.f32 0.0, %v954
    %956 = vmatmul.f32.gmra.mxu0 %v935
    %v957 = vpop.f32.mrf.mxu0
    %v958 = vadd.f32 0.0, %v957
    %959 = vdwg.mxu0
    %v961 = vsel %vm219, %v852, 0
    %v964 = vsel %vm219, %v855, 0
    %966 = vmatpush.msra.mxu0 0.0
    %967 = vmatpush.msra.mxu0 0.0
    %968 = vmatpush.msra.mxu0 0.0
    %969 = vmatpush.msra.mxu0 0.0
    %970 = vmatpush.msra.mxu0 0.0
    %971 = vmatpush.msra.mxu0 0.0
    %972 = vmatpush.msra.mxu0 0.0
    %973 = vmatpush.msra.mxu0 0.0
    %974 = vmatpush.msra.mxu0 0.0
    %975 = vmatpush.msra.mxu0 0.0
    %976 = vmatpush.msra.mxu0 0.0
    %977 = vmatpush.msra.mxu0 0.0
    %978 = vmatpush.msra.mxu0 0.0
    %979 = vmatpush.msra.mxu0 0.0
    %980 = vmatpush.msra.mxu0 0.0
    %981 = vmatpush.msra.mxu0 %v928
    %982 = vmatmul.f32.gmra.mxu0 %v961
    %v983 = vpop.f32.mrf.mxu0
    %v984 = vadd.f32 0.0, %v983
    %985 = vmatmul.f32.gmra.mxu0 %v964
    %v986 = vpop.f32.mrf.mxu0
    %v987 = vadd.f32 0.0, %v986
    %988 = vdwg.mxu0
    %v990 = vsel %vm219, %v887, 0
    %v993 = vsel %vm219, %v890, 0
    %995 = vmatpush.msra.mxu0 0.0
    %996 = vmatpush.msra.mxu0 0.0
    %997 = vmatpush.msra.mxu0 0.0
    %998 = vmatpush.msra.mxu0 0.0
    %999 = vmatpush.msra.mxu0 0.0
    %1000 = vmatpush.msra.mxu0 0.0
    %1001 = vmatpush.msra.mxu0 0.0
    %1002 = vmatpush.msra.mxu0 0.0
    %1003 = vmatpush.msra.mxu0 0.0
    %1004 = vmatpush.msra.mxu0 0.0
    %1005 = vmatpush.msra.mxu0 0.0
    %1006 = vmatpush.msra.mxu0 0.0
    %1007 = vmatpush.msra.mxu0 0.0
    %1008 = vmatpush.msra.mxu0 0.0
    %1009 = vmatpush.msra.mxu0 0.0
    %1010 = vmatpush.msra.mxu0 %v929
    %1011 = vmatmul.f32.gmra.mxu0 %v990
    %v1012 = vpop.f32.mrf.mxu0
    %v1013 = vadd.f32 0.0, %v1012
    %1014 = vmatmul.f32.gmra.mxu0 %v993
    %v1015 = vpop.f32.mrf.mxu0
    %v1016 = vadd.f32 0.0, %v1015
    %1017 = vdwg.mxu0
    %v1019 = vsel %vm219, %v922, 0
    %v1022 = vsel %vm219, %v925, 0
    %1024 = vmatpush.msra.mxu0 0.0
    %1025 = vmatpush.msra.mxu0 0.0
    %1026 = vmatpush.msra.mxu0 0.0
    %1027 = vmatpush.msra.mxu0 0.0
    %1028 = vmatpush.msra.mxu0 0.0
    %1029 = vmatpush.msra.mxu0 0.0
    %1030 = vmatpush.msra.mxu0 0.0
    %1031 = vmatpush.msra.mxu0 0.0
    %1032 = vmatpush.msra.mxu0 0.0
    %1033 = vmatpush.msra.mxu0 0.0
    %1034 = vmatpush.msra.mxu0 0.0
    %1035 = vmatpush.msra.mxu0 0.0
    %1036 = vmatpush.msra.mxu0 0.0
    %1037 = vmatpush.msra.mxu0 0.0
    %1038 = vmatpush.msra.mxu0 0.0
    %1039 = vmatpush.msra.mxu0 %v930
    %1040 = vmatmul.f32.gmra.mxu0 %v1019
    %v1041 = vpop.f32.mrf.mxu0
    %v1042 = vadd.f32 0.0, %v1041
    %1043 = vmatmul.f32.gmra.mxu0 %v1022
    %v1044 = vpop.f32.mrf.mxu0
    %v1045 = vadd.f32 0.0, %v1044
    %1046 = vdwg.mxu0
    %v1047 = vsel %vm44, %v955, 0.0
    %v1048 = vsel %vm44, %v984, 0.0
    %v1049 = vadd.f32 %v1047, %v1048
    %v1050 = vsel %vm44, %v1013, 0.0
    %v1051 = vadd.f32 %v1049, %v1050
    %v1052 = vsel %vm44, %v1042, 0.0
    %v1053 = vadd.f32 %v1051, %v1052
    %v1054 = vsel %vm44, %v958, 0.0
    %v1055 = vsel %vm44, %v987, 0.0
    %v1056 = vadd.f32 %v1054, %v1055
    %v1057 = vsel %vm44, %v1016, 0.0
    %v1058 = vadd.f32 %v1056, %v1057
    %v1059 = vsel %vm44, %v1045, 0.0
    %v1060 = vadd.f32 %v1058, %v1059
    %v1061 = vadd.f32 %v39, %v1053
    %v1062 = vadd.f32 %v40, %v1060
    %v1063 = vld [vmem:[%s8] sm:$0x1]
    %v1064 = vmul.f32 %v1061, %v1061
    %v1065 = vmul.f32 %v1062, %v1062
    %v1066 = vsel %vm44, %v1064, 0.0
    %1067 = vadd.xlane.f32.xlu0 %v1066
    %v1068 = vpop.xlane.xlu0 %1067
    %v1069 = vsel %vm44, %v1065, 0.0
    %1070 = vadd.xlane.f32.xlu0 %v1069
    %v1071 = vpop.xlane.xlu0 %1070
    %v1072 = vmul.f32 %v1068, %v57
    %v1073 = vmul.f32 %v1071, %v57
    %v1074 = vadd.f32 %v1072, 1e-06
    %v1075 = vadd.f32 %v1073, 1e-06
    %v1076 = vrsqrt.pop %v1074
    %v1077 = vmul.f32 %v1076, %v1074
    %v1078 = vmul.f32 %v1077, %v1076
    %v1079 = vmul.f32 0.5, %v1078
    %v1080 = vsub.f32 1.5, %v1079
    %v1081 = vmul.f32 %v1076, %v1080
    %vm1082 = vweird.f32 %v1074
    %vm1083 = vweird.f32 %v1076
    %vm1084 = vmor %vm1082, %vm1083
    %v1085 = vsel %vm1084, %v1076, %v1081
    %v1086 = vrsqrt.pop %v1075
    %v1087 = vmul.f32 %v1086, %v1075
    %v1088 = vmul.f32 %v1087, %v1086
    %v1089 = vmul.f32 0.5, %v1088
    %v1090 = vsub.f32 1.5, %v1089
    %v1091 = vmul.f32 %v1086, %v1090
    %vm1092 = vweird.f32 %v1075
    %vm1093 = vweird.f32 %v1086
    %vm1094 = vmor %vm1092, %vm1093
    %v1095 = vsel %vm1094, %v1086, %v1091
    %v1096 = vmul.f32 %v1061, %v1085
    %v1097 = vmul.f32 %v1062, %v1095
    %v1099 = vperm.slane %v1063, 0
    %v1101 = vmul.f32 %v1096, %v1099
    %v1102 = vmul.f32 %v1097, %v1099
    %v1103 = vld [vmem:[%s9] sm:$0xff]
    %v1104 = vld [vmem:[%s9 + $0x8] sm:$0xff]
    %v1105 = vld [vmem:[%s9 + $0x10] sm:$0xff]
    %v1106 = vld [vmem:[%s9 + $0x18] sm:$0xff]
    %v1108 = vsel %vm44, %v1101, 0
    %v1111 = vsel %vm44, %v1102, 0
    %1113 = vmatpush.msra.mxu0 0.0
    %1114 = vmatpush.msra.mxu0 0.0
    %1115 = vmatpush.msra.mxu0 0.0
    %1116 = vmatpush.msra.mxu0 0.0
    %1117 = vmatpush.msra.mxu0 0.0
    %1118 = vmatpush.msra.mxu0 0.0
    %1119 = vmatpush.msra.mxu0 0.0
    %1120 = vmatpush.msra.mxu0 0.0
    %1121 = vmatpush.msra.mxu0 0.0
    %1122 = vmatpush.msra.mxu0 0.0
    %1123 = vmatpush.msra.mxu0 0.0
    %1124 = vmatpush.msra.mxu0 0.0
    %1125 = vmatpush.msra.mxu0 %v1106
    %1126 = vmatpush.msra.mxu0 %v1105
    %1127 = vmatpush.msra.mxu0 %v1104
    %1128 = vmatpush.msra.mxu0 %v1103
    %1129 = vmatmul.f32.gmra.mxu0 %v1108
    %v1130 = vpop.f32.mrf.mxu0
    %v1131 = vadd.f32 0.0, %v1130
    %1132 = vmatmul.f32.gmra.mxu0 %v1111
    %v1133 = vpop.f32.mrf.mxu0
    %v1134 = vadd.f32 0.0, %v1133
    %1135 = vdwg.mxu0
    %v1136 = vmul.f32 %v1131, %v1131
    %v1137 = vmul.f32 %v1134, %v1134
    %v1138 = vmul.f32 %v1131, %v1136
    %v1139 = vmul.f32 %v1134, %v1137
    %v1140 = vmul.f32 %v1138, 0.044715
    %v1141 = vmul.f32 %v1139, 0.044715
    %v1142 = vadd.f32 %v1131, %v1140
    %v1143 = vadd.f32 %v1134, %v1141
    %v1144 = vmul.f32 %v1142, 0.7978846
    %v1145 = vmul.f32 %v1143, 0.7978846
    %v1146 = vtanh.pop %v1144
    %v1147 = vtanh.pop %v1145
    %v1148 = vadd.f32 %v1146, 1.0
    %v1149 = vadd.f32 %v1147, 1.0
    %v1150 = vmul.f32 %v1148, 0.5
    %v1151 = vmul.f32 %v1149, 0.5
    %v1152 = vmul.f32 %v1131, %v1150
    %v1153 = vmul.f32 %v1134, %v1151
    %v1154 = vld [vmem:[%s10] sm:$0xff]
    %v1155 = vld [vmem:[%s10 + $0x8] sm:$0xff]
    %v1156 = vld [vmem:[%s10 + $0x10] sm:$0xff]
    %v1157 = vld [vmem:[%s10 + $0x18] sm:$0xff]
    %v1158 = vld [vmem:[%s10 + $0x20] sm:$0xff]
    %v1159 = vld [vmem:[%s10 + $0x28] sm:$0xff]
    %v1160 = vld [vmem:[%s10 + $0x30] sm:$0xff]
    %v1161 = vld [vmem:[%s10 + $0x38] sm:$0xff]
    %vm1162 = vcmask 523264
    %v1164 = vsel %vm1162, %v1152, 0
    %v1167 = vsel %vm1162, %v1153, 0
    %1169 = vmatpush.msra.mxu0 0.0
    %1170 = vmatpush.msra.mxu0 0.0
    %1171 = vmatpush.msra.mxu0 0.0
    %1172 = vmatpush.msra.mxu0 0.0
    %1173 = vmatpush.msra.mxu0 0.0
    %1174 = vmatpush.msra.mxu0 0.0
    %1175 = vmatpush.msra.mxu0 0.0
    %1176 = vmatpush.msra.mxu0 0.0
    %1177 = vmatpush.msra.mxu0 %v1161
    %1178 = vmatpush.msra.mxu0 %v1160
    %1179 = vmatpush.msra.mxu0 %v1159
    %1180 = vmatpush.msra.mxu0 %v1158
    %1181 = vmatpush.msra.mxu0 %v1157
    %1182 = vmatpush.msra.mxu0 %v1156
    %1183 = vmatpush.msra.mxu0 %v1155
    %1184 = vmatpush.msra.mxu0 %v1154
    %1185 = vmatmul.f32.gmra.mxu0 %v1164
    %v1186 = vpop.f32.mrf.mxu0
    %v1187 = vadd.f32 0.0, %v1186
    %1188 = vmatmul.f32.gmra.mxu0 %v1167
    %v1189 = vpop.f32.mrf.mxu0
    %v1190 = vadd.f32 0.0, %v1189
    %1191 = vdwg.mxu0
    %v1192 = vadd.f32 %v1061, %v1187
    %v1193 = vadd.f32 %v1062, %v1190
    %1194 = vst.msk [vmem:[#allocation2] sm:$0xff] %vm44, %v1192
    %1195 = vst.msk [vmem:[#allocation2 + $0x8] sm:$0xff] %vm44, %v1193
    // Predicated region
    $region46: #{carformer_layer.1} parent=1 // pred_check
      _
    $region47: #{carformer_layer.1} parent=1 // pred_check_branch
      %1197 = sbr.rel (0) target = $region49
    $region48: #{carformer_layer.1} parent=1 // pred_region
      %1199 = vsyncadd [#allocation3], 0
      %s1200 = sshll.u32 [#allocation2], 4
      %s1201 = int_to_ptr.vmem [resolvable:$true] %s1200
      %s1202 = sshll.u32 %s11, 4
      %s1203 = int_to_ptr.hbm [resolvable:$true] %s1202
      %1208 = dma.vmem_to_hbm [thread:$0]  %s1201, 256, %s1203, [#allocation3], 128, 128, 8
    $region49: #{carformer_layer.1} parent=1 // pred_fallthru
      _
    // Predicated region
    $region50: #{carformer_layer.1} parent=1 // pred_check
      _
    $region51: #{carformer_layer.1} parent=1 // pred_check_branch
      %1210 = sbr.rel (0) target = $region53
    $region52: #{carformer_layer.1} parent=1 // pred_region
      %1212 = dma.done [#allocation3], 256
    $region53: #{carformer_layer.1} parent=1 // pred_fallthru
      _
    %1213 = vsyncpa [#allocation3], 1

</llo_original>
